<compile_context>
chip_gen: v7x
topology: tpu7x:2x2x1
jax: 0.10.0
libtpu: 0.0.40
codegen_flags: <defaults>
</compile_context>

<pallas_src>
from functools import partial

import jax
import jax.numpy as jnp
from jax.experimental import pallas as pl
from jax.experimental.pallas import tpu as pltpu


_G_CHUNK = 8   # graph-column chunk for the running max pool


# ----------------------------------------------------------------- utilities

def _round_up(x, m):
    return ((x + m - 1) // m) * m


def _vmem_capacity_bytes():
    try:
        info = pltpu.get_tpu_info()
        cap = getattr(info, "vmem_capacity_bytes", None)
        if cap:
            return int(cap)
    except Exception:
        pass
    return 64 * 1024 * 1024   # conservative (v7x per-TC VMEM)


def _clamp_vmem_limit(estimate_bytes):
    cap = _vmem_capacity_bytes()
    want = max(int(estimate_bytes) * 5 // 4 + (8 << 20), 32 << 20)
    return int(min(cap - (4 << 20), want))


def _choose_tiling(num_nodes):
    """Adjacency row-block size: ~half of per-core VMEM for the double-buffered
    bf16 row block, capped at 512 rows on 64 MiB parts (v7x) / 1024 on 128 MiB."""
    n16 = _round_up(max(num_nodes, 16), 16)        # bf16 sublane packing
    cap = _vmem_capacity_bytes()
    budget = cap // 2                              # x@w hoisted -> adj gets ~half
    tm_cap = 1024 if cap >= (96 << 20) else 512
    tm = budget // (4 * n16)                       # 2 buffers x (tm, n16) x bf16
    tm = int(max(16, min(tm_cap, tm)))
    tm = (tm // 16) * 16
    if tm >= n16:
        return n16, n16
    nb = -(-n16 // tm)                             # balance blocks -> less padding
    tm = _round_up(-(-n16 // nb), 16)
    return tm * nb, tm


def _fused_budget(n_pad, h_pad, t_pad, g_pad, c_pad):
    cap = _vmem_capacity_bytes()
    est = (n_pad * n_pad * 2                       # adj resident (bf16 scratch)
           + n_pad * t_pad * 2                     # xw2 scratch (bf16)
           + g_pad * t_pad * 4                     # pooled accumulator
           + 2 * n_pad * h_pad * 2                 # xw1 input (worst-case 2 bufs)
           + 2 * (h_pad * t_pad * 2 + t_pad * c_pad * 2
                  + (h_pad + t_pad + c_pad) * 4 + g_pad * c_pad * 4)
           + (2 << 20))                            # misc / in-kernel temps
    return est <= int(cap * 0.6), est


# ------------------------------------------------------------ shared helpers

def _pool_update(pooled_ref, h, gids):
    """Running global max pool update for one row block.

    h >= 0 (post-ReLU), so a multiplicative mask with a zero-initialised
    accumulator implements global_max_pool (every real graph has >= 1 node).
    Chunked over graph columns so the temp stays [tm, _G_CHUNK, F]."""
    tm = h.shape[0]
    g_pad = pooled_ref.shape[0]
    base = jax.lax.broadcasted_iota(jnp.int32, (tm, _G_CHUNK), 1)

    def body(c, carry):
        g0 = pl.multiple_of(c * _G_CHUNK, _G_CHUNK)
        mc = (gids == base + g0).astype(jnp.float32)               # [tm, Gc]
        cand = jnp.max(h[:, None, :] * mc[:, :, None], axis=0)     # [Gc, F]
        pooled_ref[pl.ds(g0, _G_CHUNK), :] = jnp.maximum(
            pooled_ref[pl.ds(g0, _G_CHUNK), :], cand)
        return carry

    jax.lax.fori_loop(0, g_pad // _G_CHUNK, body, 0)


# ---------------------------------------------------- layer-wise path kernels

def _gated_layer_kernel(adj_ref, xw_ref, b_ref, h_ref):
    # h = relu(adj_block @ xw + b); xw = x @ W was hoisted out of the kernel.
    agg = jnp.dot(adj_ref[...], xw_ref[...], preferred_element_type=jnp.float32)
    h_ref[...] = jnp.maximum(agg + b_ref[...], 0.0).astype(h_ref.dtype)


def _gated_layer(adj_bf, xw_bf, b_f32, out_dtype, tm):
    n_pad = adj_bf.shape[0]
    f_out = xw_bf.shape[1]
    out_bytes = jnp.dtype(out_dtype).itemsize
    est = (2 * tm * n_pad * 2 + 2 * n_pad * f_out * 2
           + 2 * tm * f_out * out_bytes + 2 * f_out * 4 + (1 << 20))
    return pl.pallas_call(
        _gated_layer_kernel,
        out_shape=jax.ShapeDtypeStruct((n_pad, f_out), out_dtype),
        grid_spec=pltpu.PrefetchScalarGridSpec(
            num_scalar_prefetch=0,
            grid=(n_pad // tm,),
            in_specs=[
                pl.BlockSpec((tm, n_pad), lambda i: (i, 0)),     # adj row block
                pl.BlockSpec((n_pad, f_out), lambda i: (0, 0)),  # xw (resident)
                pl.BlockSpec((1, f_out), lambda i: (0, 0)),      # bias
            ],
            out_specs=pl.BlockSpec((tm, f_out), lambda i: (i, 0)),
        ),
        compiler_params=pltpu.CompilerParams(
            dimension_semantics=("parallel",),                   # megacore on v7x
            vmem_limit_bytes=_clamp_vmem_limit(est),
        ),
        cost_estimate=pl.CostEstimate(
            flops=2 * n_pad * n_pad * f_out,
            transcendentals=0,
            bytes_accessed=int(n_pad * n_pad * 2 + n_pad * f_out * 2
                               + n_pad * f_out * out_bytes)),
    )(adj_bf, xw_bf, b_f32)


def _pool_classify_kernel(h_ref, batch_ref, wc_ref, bc_ref, out_ref, pooled_ref):
    i = pl.program_id(0)

    @pl.when(i == 0)
    def _init():
        pooled_ref[...] = jnp.zeros_like(pooled_ref)

    _pool_update(pooled_ref, h_ref[...], batch_ref[...])

    @pl.when(i == pl.num_programs(0) - 1)
    def _classify():
        out_ref[...] = (jnp.dot(pooled_ref[...].astype(jnp.bfloat16), wc_ref[...],
                                preferred_element_type=jnp.float32) + bc_ref[...])


def _pool_classify(h2, batch2d, wc_bf, bc_f32, tm, g_pad):
    n_pad, f = h2.shape
    c_pad = wc_bf.shape[1]
    est = (2 * tm * f * 4 + 2 * tm * 4 + g_pad * f * 4
           + 2 * (f * c_pad * 2 + c_pad * 4 + g_pad * c_pad * 4)
           + tm * _G_CHUNK * f * 4 + (1 << 20))
    return pl.pallas_call(
        _pool_classify_kernel,
        out_shape=jax.ShapeDtypeStruct((g_pad, c_pad), jnp.float32),
        grid_spec=pltpu.PrefetchScalarGridSpec(
            num_scalar_prefetch=0,
            grid=(n_pad // tm,),
            in_specs=[
                pl.BlockSpec((tm, f), lambda i: (i, 0)),         # h2 row block
                pl.BlockSpec((tm, 1), lambda i: (i, 0)),         # int32 graph ids
                pl.BlockSpec((f, c_pad), lambda i: (0, 0)),
                pl.BlockSpec((1, c_pad), lambda i: (0, 0)),
            ],
            out_specs=pl.BlockSpec((g_pad, c_pad), lambda i: (0, 0)),
            scratch_shapes=[pltpu.VMEM((g_pad, f), jnp.float32)],
        ),
        compiler_params=pltpu.CompilerParams(
            # TODO(synk): on v7x emit per-core partial maxima (parallel axis)
            # reduced outside, instead of this single-core accumulator.
            dimension_semantics=("arbitrary",),
            vmem_limit_bytes=_clamp_vmem_limit(est),
        ),
        cost_estimate=pl.CostEstimate(
            flops=2 * n_pad * g_pad * f + 2 * g_pad * f * c_pad,
            transcendentals=0,
            bytes_accessed=int(n_pad * f * 4 + n_pad * 4 + f * c_pad * 2
                               + g_pad * c_pad * 4)),
    )(h2, batch2d, wc_bf, bc_f32)


# --------------------------------------------------------- fused path kernel

def _fused_kernel(adj_hbm, xw1_ref, w2_ref, b1_ref, b2_ref, wc_ref, bc_ref,
                  batch_ref, out_ref, adj_vmem, xw2_vmem, pooled_ref, dma_sem):
    phase = pl.program_id(0)
    i = pl.program_id(1)
    tm = batch_ref.shape[0]

    @pl.when(jnp.logical_and(phase == 0, i == 0))
    def _prologue():
        pooled_ref[...] = jnp.zeros_like(pooled_ref)
        cp = pltpu.make_async_copy(adj_hbm, adj_vmem, dma_sem)   # adj read ONCE
        cp.start()
        cp.wait()

    r0 = pl.multiple_of(i * tm, tm)
    adj_blk = adj_vmem[pl.ds(r0, tm), :]                 # [tm, n_pad] bf16

    @pl.when(phase == 0)
    def _layer1():
        h1 = jnp.maximum(
            jnp.dot(adj_blk, xw1_ref[...], preferred_element_type=jnp.float32)
            + b1_ref[...], 0.0)
        xw2_vmem[pl.ds(r0, tm), :] = jnp.dot(
            h1.astype(jnp.bfloat16), w2_ref[...],
            preferred_element_type=jnp.float32).astype(jnp.bfloat16)

    @pl.when(phase == 1)
    def _layer2_pool():
        h2 = jnp.maximum(
            jnp.dot(adj_blk, xw2_vmem[...], preferred_element_type=jnp.float32)
            + b2_ref[...], 0.0)
        _pool_update(pooled_ref, h2, batch_ref[...])

    @pl.when(jnp.logical_and(phase == 1, i == pl.num_programs(1) - 1))
    def _classify():
        out_ref[...] = (jnp.dot(pooled_ref[...].astype(jnp.bfloat16), wc_ref[...],
                                preferred_element_type=jnp.float32) + bc_ref[...])


def _fused_forward(adj_bf, p, est):
    n_pad = adj_bf.shape[0]
    tm = p["tm"]
    h_pad = p["xw1"].shape[1]
    t_pad = p["w2"].shape[1]
    g_pad = p["g_pad"]
    c_pad = p["wc"].shape[1]
    nb = n_pad // tm
    flops = (2 * n_pad * n_pad * (h_pad + t_pad) + 2 * n_pad * h_pad * t_pad
             + 2 * g_pad * t_pad * c_pad)
    bytes_acc = (n_pad * n_pad * 2 + n_pad * h_pad * 2 + h_pad * t_pad * 2
                 + t_pad * c_pad * 2 + n_pad * 4 + g_pad * c_pad * 4)
    return pl.pallas_call(
        _fused_kernel,
        out_shape=jax.ShapeDtypeStruct((g_pad, c_pad), jnp.float32),
        grid_spec=pltpu.PrefetchScalarGridSpec(
            num_scalar_prefetch=0,
            grid=(2, nb),                                        # (phase, row block)
            in_specs=[
                pl.BlockSpec(memory_space=pl.ANY),               # adj stays in HBM
                pl.BlockSpec((n_pad, h_pad), lambda ph, i: (0, 0)),   # xw1
                pl.BlockSpec((h_pad, t_pad), lambda ph, i: (0, 0)),   # w2
                pl.BlockSpec((1, h_pad), lambda ph, i: (0, 0)),       # b1
                pl.BlockSpec((1, t_pad), lambda ph, i: (0, 0)),       # b2
                pl.BlockSpec((t_pad, c_pad), lambda ph, i: (0, 0)),   # wc
                pl.BlockSpec((1, c_pad), lambda ph, i: (0, 0)),       # bc
                pl.BlockSpec((tm, 1), lambda ph, i: (i, 0)),          # graph ids
            ],
            out_specs=pl.BlockSpec((g_pad, c_pad), lambda ph, i: (0, 0)),
            scratch_shapes=[
                pltpu.VMEM((n_pad, n_pad), jnp.bfloat16),   # resident adjacency
                pltpu.VMEM((n_pad, t_pad), jnp.bfloat16),   # xw2 = h1 @ w2
                pltpu.VMEM((g_pad, t_pad), jnp.float32),    # pooled max
                pltpu.SemaphoreType.DMA,                    # adj copy-in
            ],
        ),
        compiler_params=pltpu.CompilerParams(
            dimension_semantics=("arbitrary", "arbitrary"),
            vmem_limit_bytes=_clamp_vmem_limit(est),
        ),
        cost_estimate=pl.CostEstimate(flops=int(flops), transcendentals=0,
                                      bytes_accessed=int(bytes_acc)),
    )(adj_bf, p["xw1"], p["w2"], p["b1"], p["b2"], p["wc"], p["bc"], p["batch2d"])


# --------------------------------------------------------------- plain-JAX glue

def build_norm_adj(edge_index, num_nodes, n_pad=None):
    """Dense GCN-normalized adjacency with self loops (matches GatedGraphLayer),
    scattered directly at the padded size (scatter indices are all < num_nodes)."""
    n = num_nodes
    n_pad = n if n_pad is None else n_pad
    idx = jnp.arange(n, dtype=edge_index.dtype)
    ei = jnp.concatenate([edge_index, jnp.stack([idx, idx], axis=0)], axis=1)
    row, col = ei[0], ei[1]                   # row = src j, col = tgt i
    deg = jnp.zeros((n_pad,), jnp.float32).at[row].add(1.0)
    dis = jnp.where(deg > 0, jax.lax.rsqrt(jnp.where(deg > 0, deg, 1.0)), 0.0)
    norm = dis[row] * dis[col]
    # aggr_out[i] = sum_{e: col[e]==i} norm_e * h[row[e]]  =>  adj[i, j] += norm
    return jnp.zeros((n_pad, n_pad), jnp.float32).at[col, row].add(norm)


def _prepare(pos, edge_index, batch, params, num_graphs):
    w1, b1, w2, b2, wc, bc = params
    n, _ = pos.shape
    hidden = w1.shape[1]
    two_h = w2.shape[1]
    num_classes = wc.shape[1]

    n_pad, tm = _choose_tiling(n)
    g_pad = _round_up(max(num_graphs, 1), _G_CHUNK)
    h_pad = _round_up(hidden, 128)             # lane-dense hidden features
    t_pad = _round_up(two_h, 128)
    c_pad = _round_up(num_classes, 128)        # lane-dense classifier output

    # Adjacency built at padded size and cast to bf16 in the same (jitted)
    # computation: halves the O(N^2) DMA and avoids extra f32 copies.
    adj = build_norm_adj(edge_index, n, n_pad).astype(jnp.bfloat16)

    # Hoisted x @ W for layer 1 (tiny [n,3]x[3,H] matmul), padded + bf16.
    xw1 = (jnp.zeros((n_pad, h_pad), jnp.float32)
           .at[:n, :hidden].set(jnp.dot(pos, w1, preferred_element_type=jnp.float32))
           .astype(jnp.bfloat16))

    b1p = jnp.zeros((1, h_pad), jnp.float32).at[:, :hidden].set(b1)
    w2p = (jnp.zeros((h_pad, t_pad), jnp.float32).at[:hidden, :two_h].set(w2)
           .astype(jnp.bfloat16))
    b2p = jnp.zeros((1, t_pad), jnp.float32).at[:, :two_h].set(b2)
    wcp = (jnp.zeros((t_pad, c_pad), jnp.float32).at[:two_h, :num_classes].set(wc)
           .astype(jnp.bfloat16))
    bcp = jnp.zeros((1, c_pad), jnp.float32).at[:, :num_classes].set(bc)

    # Padded nodes get graph id -1 -> never match any graph in the pool mask.
    batch2d = (jnp.full((n_pad, 1), -1, jnp.int32)
               .at[:n, 0].set(batch.astype(jnp.int32)))

    return dict(adj=adj, xw1=xw1, b1=b1p, w2=w2p, b2=b2p, wc=wcp, bc=bcp,
                batch2d=batch2d, tm=tm, g_pad=g_pad, num_classes=num_classes)


@partial(jax.jit, static_argnames=("num_graphs", "force_path"))
def ggsnn_forward(pos, edge_index, batch, params, num_graphs, force_path=None):
    p = _prepare(pos, edge_index, batch, params, num_graphs)
    adj = p["adj"]
    n_pad = adj.shape[0]
    tm = p["tm"]
    h_pad = p["xw1"].shape[1]
    t_pad = p["w2"].shape[1]
    c_pad = p["wc"].shape[1]
    g_pad = p["g_pad"]

    fits, est_fused = _fused_budget(n_pad, h_pad, t_pad, g_pad, c_pad)
    use_fused = fits if force_path is None else (force_path == "fused")

    if use_fused:
        # adjacency read from HBM once; h1/h2 never leave VMEM
        logits = _fused_forward(adj, p, est_fused)
    else:
        h1 = _gated_layer(adj, p["xw1"], p["b1"], jnp.bfloat16, tm)
        xw2 = jnp.dot(h1, p["w2"],
                      preferred_element_type=jnp.float32).astype(jnp.bfloat16)
        h2 = _gated_layer(adj, xw2, p["b2"], jnp.float32, tm)
        logits = _pool_classify(h2, p["batch2d"], p["wc"], p["bc"], tm, g_pad)

    return logits[:num_graphs, :p["num_classes"]]


# ------------------------------------------------------------------ references

def reference_forward_mirror(pos, edge_index, batch, params, num_graphs):
    """Plain-JAX replay of the exact kernel math (same padding / bf16 casts)."""
    p = _prepare(pos, edge_index, batch, params, num_graphs)
    f32 = jnp.float32
    h1 = jnp.maximum(jnp.dot(p["adj"], p["xw1"], preferred_element_type=f32)
                     + p["b1"], 0.0)
    xw2 = jnp.dot(h1.astype(jnp.bfloat16), p["w2"],
                  preferred_element_type=f32).astype(jnp.bfloat16)
    h2 = jnp.maximum(jnp.dot(p["adj"], xw2, preferred_element_type=f32)
                     + p["b2"], 0.0)
    mask = (p["batch2d"] == jnp.arange(p["g_pad"], dtype=jnp.int32)[None, :]
            ).astype(f32)
    pooled = jnp.max(h2[:, None, :] * mask[:, :, None], axis=0)   # h2 >= 0
    logits = (jnp.dot(pooled.astype(jnp.bfloat16), p["wc"],
                      preferred_element_type=f32) + p["bc"])
    return logits[:num_graphs, :p["num_classes"]]


def reference_forward_f32(pos, edge_index, batch, params, num_graphs):
    """Pure-f32 reference of the original PyTorch forward."""
    w1, b1, w2, b2, wc, bc = params
    adj = build_norm_adj(edge_index, pos.shape[0])
    h1 = jnp.maximum(adj @ (pos @ w1) + b1, 0.0)
    h2 = jnp.maximum(adj @ (h1 @ w2) + b2, 0.0)
    mask = batch[None, :] == jnp.arange(num_graphs)[:, None]
    pooled = jnp.max(jnp.where(mask[:, :, None], h2[None], -1e30), axis=1)
    return pooled @ wc + bc


# ------------------------------------------------------------------------ main

if __name__ == "__main__":
    hidden_dim = 32
    num_classes = 2
    num_nodes = 8
    num_edges = 16
    num_graphs = 2

    key = jax.random.PRNGKey(0)
    k_pos, k_ei, k_w1, k_b1, k_w2, k_b2, k_wc, k_bc = jax.random.split(key, 8)

    # inputs
    pos = jax.random.normal(k_pos, (num_nodes, 3), jnp.float32)
    edge_index = jax.random.randint(k_ei, (2, num_edges), 0, num_nodes, jnp.int32)
    batch = jnp.array([0, 0, 0, 0, 1, 1, 1, 1], jnp.int32)

    # parameters stored as [in, out] (i.e. W.T vs torch Linear)
    def lin(kw, kb, fan_in, fan_out):
        s = 1.0 / jnp.sqrt(jnp.float32(fan_in))
        w = jax.random.uniform(kw, (fan_in, fan_out), jnp.float32, -s, s)
        b = jax.random.uniform(kb, (1, fan_out), jnp.float32, -s, s)
        return w, b

    w1, b1 = lin(k_w1, k_b1, 3, hidden_dim)
    w2, b2 = lin(k_w2, k_b2, hidden_dim, 2 * hidden_dim)
    wc, bc = lin(k_wc, k_bc, 2 * hidden_dim, num_classes)
    params = (w1, b1, w2, b2, wc, bc)

    # auto path (fused: the bf16 adjacency fits comfortably in VMEM here)
    out = jax.block_until_ready(
        ggsnn_forward(pos, edge_index, batch, params, num_graphs=num_graphs))
    # streaming (layer-wise) fallback path, exercised explicitly
    out_layers = jax.block_until_ready(
        ggsnn_forward(pos, edge_index, batch, params, num_graphs=num_graphs,
                      force_path="layers"))

    mirror = reference_forward_mirror(pos, edge_index, batch, params, num_graphs)
    ref = reference_forward_f32(pos, edge_index, batch, params, num_graphs)

    assert out.shape == (num_graphs, num_classes), out.shape
    assert out_layers.shape == (num_graphs, num_classes), out_layers.shape
    # tight check vs the bf16-mirroring reference (same casts / padding)
    assert jnp.allclose(out, mirror, atol=5e-3, rtol=5e-3), (out, mirror)
    assert jnp.allclose(out_layers, mirror, atol=5e-3, rtol=5e-3), (out_layers, mirror)
    # loose check vs the pure-f32 reference (bf16 MXU rounding)
    assert jnp.allclose(out, ref, atol=1e-1, rtol=1e-1), (out, ref)

    print("KERNEL_OK")
</pallas_src>

<mosaic_0001>
module attributes {stable_mosaic.version = 11 : i64} {
  func.func @_fused_kernel(%arg0: i32, %arg1: i32, %arg2: memref<16x16xbf16, #tpu.memory_space<any>>, %arg3: memref<16x128xbf16, #tpu.memory_space<vmem>>, %arg4: memref<128x128xbf16, #tpu.memory_space<vmem>>, %arg5: memref<1x128xf32, #tpu.memory_space<vmem>>, %arg6: memref<1x128xf32, #tpu.memory_space<vmem>>, %arg7: memref<128x128xbf16, #tpu.memory_space<vmem>>, %arg8: memref<1x128xf32, #tpu.memory_space<vmem>>, %arg9: memref<16x1xi32, #tpu.memory_space<vmem>>, %arg10: memref<8x128xf32, #tpu.memory_space<vmem>>, %arg11: memref<16x16xbf16, #tpu.memory_space<vmem>>, %arg12: memref<16x128xbf16, #tpu.memory_space<vmem>>, %arg13: memref<8x128xf32, #tpu.memory_space<vmem>>, %arg14: memref<!tpu.dma_semaphore, #tpu.memory_space<semaphore_mem>>) attributes {dimension_semantics = [#tpu.dimension_semantics<arbitrary>, #tpu.dimension_semantics<arbitrary>], iteration_bounds = array<i64: 2, 1>, scalar_prefetch = 0 : i64, scratch_operands = 4 : i64, tpu.core_type = #tpu.core_type<tc>, window_params = [{}, {pipeline_mode = #tpu.pipeline_mode<synchronous>, transform_indices = @transform_1, window_bounds = array<i64: 16, 128>}, {pipeline_mode = #tpu.pipeline_mode<synchronous>, transform_indices = @transform_2, window_bounds = array<i64: 128, 128>}, {pipeline_mode = #tpu.pipeline_mode<synchronous>, transform_indices = @transform_3, window_bounds = array<i64: 1, 128>}, {pipeline_mode = #tpu.pipeline_mode<synchronous>, transform_indices = @transform_4, window_bounds = array<i64: 1, 128>}, {pipeline_mode = #tpu.pipeline_mode<synchronous>, transform_indices = @transform_5, window_bounds = array<i64: 128, 128>}, {pipeline_mode = #tpu.pipeline_mode<synchronous>, transform_indices = @transform_6, window_bounds = array<i64: 1, 128>}, {transform_indices = @transform_7, window_bounds = array<i64: 16, 1>}, {pipeline_mode = #tpu.pipeline_mode<synchronous>, transform_indices = @transform_8, window_bounds = array<i64: 8, 128>}]} {
    %c0_i32 = arith.constant 0 : i32
    %0 = arith.cmpi eq, %arg0, %c0_i32 : i32
    %c0_i32_0 = arith.constant 0 : i32
    %1 = arith.cmpi eq, %arg1, %c0_i32_0 : i32
    %2 = arith.andi %0, %1 : i1
    %3 = arith.extui %2 : i1 to i32
    %c0_i32_1 = arith.constant 0 : i32
    %4 = arith.cmpi ne, %3, %c0_i32_1 : i32
    scf.if %4 {
      %cst = arith.constant 0.000000e+00 : f32
      %20 = vector.broadcast %cst : f32 to vector<8x128xf32>
      %c0_8 = arith.constant 0 : index
      %c0_9 = arith.constant 0 : index
      %21 = vector.load %arg13[%c0_8, %c0_9] : memref<8x128xf32, #tpu.memory_space<vmem>>, vector<8x128xf32>
      tpu.vector_store %arg13[%c0_8, %c0_9], %20 {strides = array<i32>} : memref<8x128xf32, #tpu.memory_space<vmem>>, vector<8x128xf32>,
      tpu.enqueue_dma source(%arg2 : memref<16x16xbf16, #tpu.memory_space<any>>) target(%arg11 : memref<16x16xbf16, #tpu.memory_space<vmem>>) target_semaphore(%arg14 : memref<!tpu.dma_semaphore, #tpu.memory_space<semaphore_mem>>)
      tpu.wait_dma2 semaphore(%arg14 : memref<!tpu.dma_semaphore, #tpu.memory_space<semaphore_mem>>) src(%arg2 : memref<16x16xbf16, #tpu.memory_space<any>>) dst(%arg11 : memref<16x16xbf16, #tpu.memory_space<vmem>>)
    } else {
    }
    %c16_i32 = arith.constant 16 : i32
    %5 = arith.muli %arg1, %c16_i32 : i32
    %6 = tpu.assume_multiple %5, 16 : i32
    %7 = arith.index_cast %6 : i32 to index
    %c0 = arith.constant 0 : index
    %8 = vector.load %arg11[%7, %c0] : memref<16x16xbf16, #tpu.memory_space<vmem>>, vector<16x16xbf16>
    %c0_i32_2 = arith.constant 0 : i32
    %9 = arith.cmpi eq, %arg0, %c0_i32_2 : i32
    %10 = arith.extui %9 : i1 to i32
    %c0_i32_3 = arith.constant 0 : i32
    %11 = arith.cmpi ne, %10, %c0_i32_3 : i32
    scf.if %11 {
      %c0_8 = arith.constant 0 : index
      %c0_9 = arith.constant 0 : index
      %20 = vector.load %arg3[%c0_8, %c0_9] : memref<16x128xbf16, #tpu.memory_space<vmem>>, vector<16x128xbf16>
      %cst = arith.constant dense<0.000000e+00> : vector<16x128xf32>
      %21 = tpu.matmul %8, %20, %cst {dimension_numbers = #tpu.dot_dimension_numbers<[1], [0], [0], [1], [0, 0, 1, 1], [], []>} : vector<16x16xbf16>, vector<16x128xbf16>, vector<16x128xf32> -> vector<16x128xf32>
      %c0_10 = arith.constant 0 : index
      %c0_11 = arith.constant 0 : index
      %22 = vector.load %arg5[%c0_10, %c0_11] : memref<1x128xf32, #tpu.memory_space<vmem>>, vector<1x128xf32>
      %23 = vector.broadcast %22 : vector<1x128xf32> to vector<16x128xf32>
      %24 = arith.addf %21, %23 : vector<16x128xf32>
      %cst_12 = arith.constant 0.000000e+00 : f32
      %25 = vector.broadcast %cst_12 : f32 to vector<16x128xf32>
      %26 = arith.maximumf %24, %25 : vector<16x128xf32>
      %27 = arith.truncf %26 : vector<16x128xf32> to vector<16x128xbf16>
      %c0_13 = arith.constant 0 : index
      %c0_14 = arith.constant 0 : index
      %28 = vector.load %arg4[%c0_13, %c0_14] : memref<128x128xbf16, #tpu.memory_space<vmem>>, vector<128x128xbf16>
      %cst_15 = arith.constant dense<0.000000e+00> : vector<16x128xf32>
      %29 = tpu.matmul %27, %28, %cst_15 {dimension_numbers = #tpu.dot_dimension_numbers<[1], [0], [0], [1], [0, 0, 1, 1], [], []>} : vector<16x128xbf16>, vector<128x128xbf16>, vector<16x128xf32> -> vector<16x128xf32>
      %30 = arith.truncf %29 : vector<16x128xf32> to vector<16x128xbf16>
      %31 = arith.index_cast %6 : i32 to index
      %c0_16 = arith.constant 0 : index
      %32 = vector.load %arg12[%31, %c0_16] : memref<16x128xbf16, #tpu.memory_space<vmem>>, vector<16x128xbf16>
      tpu.vector_store %arg12[%31, %c0_16], %30 {strides = array<i32>} : memref<16x128xbf16, #tpu.memory_space<vmem>>, vector<16x128xbf16>,
    } else {
    }
    %c1_i32 = arith.constant 1 : i32
    %12 = arith.cmpi eq, %arg0, %c1_i32 : i32
    %13 = arith.extui %12 : i1 to i32
    %c0_i32_4 = arith.constant 0 : i32
    %14 = arith.cmpi ne, %13, %c0_i32_4 : i32
    scf.if %14 {
      %c0_8 = arith.constant 0 : index
      %c0_9 = arith.constant 0 : index
      %20 = vector.load %arg12[%c0_8, %c0_9] : memref<16x128xbf16, #tpu.memory_space<vmem>>, vector<16x128xbf16>
      %cst = arith.constant dense<0.000000e+00> : vector<16x128xf32>
      %21 = tpu.matmul %8, %20, %cst {dimension_numbers = #tpu.dot_dimension_numbers<[1], [0], [0], [1], [0, 0, 1, 1], [], []>} : vector<16x16xbf16>, vector<16x128xbf16>, vector<16x128xf32> -> vector<16x128xf32>
      %c0_10 = arith.constant 0 : index
      %c0_11 = arith.constant 0 : index
      %22 = vector.load %arg6[%c0_10, %c0_11] : memref<1x128xf32, #tpu.memory_space<vmem>>, vector<1x128xf32>
      %23 = vector.broadcast %22 : vector<1x128xf32> to vector<16x128xf32>
      %24 = arith.addf %21, %23 : vector<16x128xf32>
      %cst_12 = arith.constant 0.000000e+00 : f32
      %25 = vector.broadcast %cst_12 : f32 to vector<16x128xf32>
      %26 = arith.maximumf %24, %25 : vector<16x128xf32>
      %c0_13 = arith.constant 0 : index
      %c0_14 = arith.constant 0 : index
      %27 = vector.load %arg9[%c0_13, %c0_14] : memref<16x1xi32, #tpu.memory_space<vmem>>, vector<16x1xi32>
      %28 = tpu.iota {dimensions = array<i32: 1>} : vector<16x8xi32>
      %c0_i32_15 = arith.constant 0 : i32
      %c8_i32 = arith.constant 8 : i32
      %29 = arith.muli %c0_i32_15, %c8_i32 : i32
      %30 = tpu.assume_multiple %29, 8 : i32
      %31 = vector.broadcast %30 : i32 to vector<16x8xi32>
      %32 = arith.addi %28, %31 : vector<16x8xi32>
      %33 = vector.broadcast %27 : vector<16x1xi32> to vector<16x8xi32>
      %34 = arith.cmpi eq, %33, %32 : vector<16x8xi32>
      %35 = arith.extui %34 : vector<16x8xi1> to vector<16x8xi32>
      %36 = arith.sitofp %35 : vector<16x8xi32> to vector<16x8xf32>
      %37 = vector.shape_cast %26 : vector<16x128xf32> to vector<16x1x128xf32>
      %38 = vector.shape_cast %36 : vector<16x8xf32> to vector<16x8x1xf32>
      %39 = vector.broadcast %37 : vector<16x1x128xf32> to vector<16x8x128xf32>
      %40 = vector.broadcast %38 : vector<16x8x1xf32> to vector<16x8x128xf32>
      %41 = arith.mulf %39, %40 : vector<16x8x128xf32>
      %cst_16 = arith.constant dense<0xFF800000> : vector<8x128xf32>
      %42 = vector.multi_reduction <maximumf>, %41, %cst_16 [0] : vector<16x8x128xf32> to vector<8x128xf32>
      %43 = arith.index_cast %30 : i32 to index
      %c0_17 = arith.constant 0 : index
      %44 = vector.load %arg13[%43, %c0_17] : memref<8x128xf32, #tpu.memory_space<vmem>>, vector<8x128xf32>
      %45 = arith.maximumf %44, %42 : vector<8x128xf32>
      %46 = arith.index_cast %30 : i32 to index
      %c0_18 = arith.constant 0 : index
      %47 = vector.load %arg13[%46, %c0_18] : memref<8x128xf32, #tpu.memory_space<vmem>>, vector<8x128xf32>
      tpu.vector_store %arg13[%46, %c0_18], %45 {strides = array<i32>} : memref<8x128xf32, #tpu.memory_space<vmem>>, vector<8x128xf32>,
      %c1_i32_19 = arith.constant 1 : i32
    } else {
    }
    %c1_i32_5 = arith.constant 1 : i32
    %15 = arith.cmpi eq, %arg0, %c1_i32_5 : i32
    %c0_i32_6 = arith.constant 0 : i32
    %16 = arith.cmpi eq, %arg1, %c0_i32_6 : i32
    %17 = arith.andi %15, %16 : i1
    %18 = arith.extui %17 : i1 to i32
    %c0_i32_7 = arith.constant 0 : i32
    %19 = arith.cmpi ne, %18, %c0_i32_7 : i32
    scf.if %19 {
      %c0_8 = arith.constant 0 : index
      %c0_9 = arith.constant 0 : index
      %20 = vector.load %arg13[%c0_8, %c0_9] : memref<8x128xf32, #tpu.memory_space<vmem>>, vector<8x128xf32>
      %21 = arith.truncf %20 : vector<8x128xf32> to vector<8x128xbf16>
      %c0_10 = arith.constant 0 : index
      %c0_11 = arith.constant 0 : index
      %22 = vector.load %arg7[%c0_10, %c0_11] : memref<128x128xbf16, #tpu.memory_space<vmem>>, vector<128x128xbf16>
      %cst = arith.constant dense<0.000000e+00> : vector<8x128xf32>
      %23 = tpu.matmul %21, %22, %cst {dimension_numbers = #tpu.dot_dimension_numbers<[1], [0], [0], [1], [0, 0, 1, 1], [], []>} : vector<8x128xbf16>, vector<128x128xbf16>, vector<8x128xf32> -> vector<8x128xf32>
      %c0_12 = arith.constant 0 : index
      %c0_13 = arith.constant 0 : index
      %24 = vector.load %arg8[%c0_12, %c0_13] : memref<1x128xf32, #tpu.memory_space<vmem>>, vector<1x128xf32>
      %25 = vector.broadcast %24 : vector<1x128xf32> to vector<8x128xf32>
      %26 = arith.addf %23, %25 : vector<8x128xf32>
      %c0_14 = arith.constant 0 : index
      %c0_15 = arith.constant 0 : index
      %27 = vector.load %arg10[%c0_14, %c0_15] : memref<8x128xf32, #tpu.memory_space<vmem>>, vector<8x128xf32>
      tpu.vector_store %arg10[%c0_14, %c0_15], %26 {strides = array<i32>} : memref<8x128xf32, #tpu.memory_space<vmem>>, vector<8x128xf32>,
    } else {
    }
    return
  }
  func.func @transform_1(%arg0: i32, %arg1: i32) -> (i32, i32) {
    %c0_i32 = arith.constant 0 : i32
    %c0_i32_0 = arith.constant 0 : i32
    %c0_i32_1 = arith.constant 0 : i32
    return %c0_i32, %c0_i32_0 : i32, i32
  }
  func.func @transform_2(%arg0: i32, %arg1: i32) -> (i32, i32) {
    %c0_i32 = arith.constant 0 : i32
    %c0_i32_0 = arith.constant 0 : i32
    %c0_i32_1 = arith.constant 0 : i32
    return %c0_i32, %c0_i32_0 : i32, i32
  }
  func.func @transform_3(%arg0: i32, %arg1: i32) -> (i32, i32) {
    %c0_i32 = arith.constant 0 : i32
    %c0_i32_0 = arith.constant 0 : i32
    %c0_i32_1 = arith.constant 0 : i32
    return %c0_i32, %c0_i32_0 : i32, i32
  }
  func.func @transform_4(%arg0: i32, %arg1: i32) -> (i32, i32) {
    %c0_i32 = arith.constant 0 : i32
    %c0_i32_0 = arith.constant 0 : i32
    %c0_i32_1 = arith.constant 0 : i32
    return %c0_i32, %c0_i32_0 : i32, i32
  }
  func.func @transform_5(%arg0: i32, %arg1: i32) -> (i32, i32) {
    %c0_i32 = arith.constant 0 : i32
    %c0_i32_0 = arith.constant 0 : i32
    %c0_i32_1 = arith.constant 0 : i32
    return %c0_i32, %c0_i32_0 : i32, i32
  }
  func.func @transform_6(%arg0: i32, %arg1: i32) -> (i32, i32) {
    %c0_i32 = arith.constant 0 : i32
    %c0_i32_0 = arith.constant 0 : i32
    %c0_i32_1 = arith.constant 0 : i32
    return %c0_i32, %c0_i32_0 : i32, i32
  }
  func.func @transform_7(%arg0: i32, %arg1: i32) -> (i32, i32) {
    %c0_i32 = arith.constant 0 : i32
    %c0_i32_0 = arith.constant 0 : i32
    return %arg1, %c0_i32 : i32, i32
  }
  func.func @transform_8(%arg0: i32, %arg1: i32) -> (i32, i32) {
    %c0_i32 = arith.constant 0 : i32
    %c0_i32_0 = arith.constant 0 : i32
    %c0_i32_1 = arith.constant 0 : i32
    return %c0_i32, %c0_i32_0 : i32, i32
  }
}

</mosaic_0001>

<llo_original>
// kernel: mul.1
$region0: #{mul.1}
  #allocation0 [shape = 's32[1]{0}', space=sflag, size = 0x4, scoped, tag = 'scoped memory for mul.1']
  %s0 = inlined_call_operand.vmem [shape: f32[24], index: 0, kind: input, shape index: {}]
  %s1 = inlined_call_operand.vmem [shape: f32[24], index: 1, kind: input, shape index: {}]
  %s2 = inlined_call_operand.vmem [shape: f32[24], index: 2, kind: output, shape index: {}]
  %v3 = vld [vmem:[%s0] sm:$0x1]
  %v4 = vld [vmem:[%s1] sm:$0x1]
  %5 = xla_tuple %v3, %v4
  %6 = xla_tuple %5
  %v7 = vmul.f32 %v3, %v4
  %8 = xla_tuple %v7
  %9 = vst [vmem:[%s2] sm:$0x1] %v7

// kernel: ggsnn_forward.1
$region0: #{ggsnn_forward.1}
  #allocation0 [shape = 'u32[]', space=smem, size = 0x4, offset = 0x4, fixed_abs, tag = 'smem constant byte address 0x4 - core index']
  #allocation1 [shape = 'u32[144,128]{1,0:T(1,128)}', space=vmem, size = 0x12000, scoped, tag = 'internal scratch']
  #allocation2 [shape = 'bf16[16,16]{1,0:T(16,128)(2,1)}', space=vmem, size = 0x1000, scoped, tag = 'scratch operand']
  #allocation3 [shape = 'bf16[16,128]{1,0:T(16,128)(2,1)}', space=vmem, size = 0x1000, scoped, tag = 'scratch operand']
  #allocation4 [shape = 'f32[8,128]{1,0:T(8,128)}', space=vmem, size = 0x1000, scoped, tag = 'scratch operand']
  #allocation5 [shape = 's32[1]{0}', space=sflag, size = 0x4, scoped, tag = 'scratch operand']
  #allocation6 [shape = 's32[]', space=sflag, size = 0x4, offset = 0, fixed_abs, tag = 'sflag constant byte address 0x0 - dummy sync flag']
  %s0 = inlined_call_operand.vmem [shape: bf16[16,16], index: 0, kind: input, shape index: {}]
  %s1 = inlined_call_operand.vmem [shape: bf16[16,128], index: 1, kind: input, shape index: {}]
  %s2 = inlined_call_operand.vmem [shape: bf16[128,128], index: 2, kind: input, shape index: {}]
  %s3 = inlined_call_operand.vmem [shape: f32[1,128], index: 3, kind: input, shape index: {}]
  %s4 = inlined_call_operand.vmem [shape: f32[1,128], index: 4, kind: input, shape index: {}]
  %s5 = inlined_call_operand.vmem [shape: bf16[128,128], index: 5, kind: input, shape index: {}]
  %s6 = inlined_call_operand.vmem [shape: f32[1,128], index: 6, kind: input, shape index: {}]
  %s7 = inlined_call_operand.vmem [shape: s32[16,1], index: 7, kind: input, shape index: {}]
  %s8 = inlined_call_operand.vmem [shape: f32[8,128], index: 8, kind: output, shape index: {}]
  %s9 = sld [smem:[#allocation0]]
  $region111: #{ggsnn_forward.1} parent=0
    _
  %s11 = ssub.s32 1, %s9
  %s12 = scalar_select 0, %s11, %s9
  loop: start=0, step=1, limit=4
  $region2: #{ggsnn_forward.1} parent=0 // loop_pre_header
    _
  $region3: #{ggsnn_forward.1} parent=0 // loop_header
    %s14 = sphi 0, %s18
    %p15 = scmp.ge.s32.totalorder %s14, 4
    %s21 = sphi 0, %s33
    %s22 = sphi 0, %s29
    %s23 = sphi 0, %s21
    %s24 = sphi 0, %s22
    %s25 = sphi 0, %s23
    %s26 = sphi 0, %s24
    %s34 = sphi 0, %s34
    %s36 = sphi 0, %s34
    %s37 = sphi 0, %s36
    %s51 = sphi 0, %s37
    %s55 = sphi 0, %s55
    %s57 = sphi 0, %s55
    %s58 = sphi 0, %s57
    %s72 = sphi 0, %s58
    %s76 = sphi 0, %s76
    %s78 = sphi 0, %s76
    %s79 = sphi 0, %s78
    %s93 = sphi 0, %s79
    %s97 = sphi 0, %s97
    %s99 = sphi 0, %s97
    %s100 = sphi 0, %s99
    %s114 = sphi 0, %s100
    %s118 = sphi 0, %s118
    %s120 = sphi 0, %s118
    %s121 = sphi 0, %s120
    %s135 = sphi 0, %s121
    %s139 = sphi 0, %s139
    %s141 = sphi 0, %s139
    %s142 = sphi 0, %s141
    %s156 = sphi 0, %s142
    %s162 = sphi 0, %s164
    %s165 = sphi 0, %s162
    %s166 = sphi 0, %s165
    %s182 = sphi 0, %s166
    %s186 = sphi 0, %s186
    %s188 = sphi 0, %s186
    %s189 = sphi 0, %s188
    %s203 = sphi 0, %s189
  $region4: #{ggsnn_forward.1} parent=0 // loop_header_branch
    %17 = sbr.rel (%p15) target = $region8
  $region5: #{ggsnn_forward.1} parent=0 // loop_body
    %s19 = ssub.s32 %s14, 1
    %s20 = ssub.s32 %s14, 2
    %s27 = sadd.s32 1, %s22
    %p28 = scmp.ge.s32.totalorder %s27, 1
    %s29 = scalar_select %p28, 0, %s27
    %s30 = sadd.s32 1, %s21
    %s31 = scalar_select %p28, %s30, %s21
    %p32 = scmp.ge.s32.totalorder %s31, 2
    %s33 = scalar_select %p32, 0, %s31
    %s35 = sadd.s32 %s34, 1
    %p38 = scmp.eq.s32.totalorder %s14, 1
    %p39 = scmp.ne.s32.totalorder %s34, %s36
    %p40 = scmp.eq.s32.totalorder %s14, 0
    %p41 = por %p39, %p40
    %p42 = scmp.ne.s32.totalorder %s34, %s36
    %p43 = scmp.eq.s32.totalorder %s19, 1
    %p44 = por %p42, %p43
    %p45 = scmp.ne.s32.totalorder %s36, %s37
    %p46 = scmp.eq.s32.totalorder %s19, 0
    %p47 = por %p45, %p46
    %p48 = scmp.ne.s32.totalorder %s36, %s37
    %p49 = scmp.eq.s32.totalorder %s20, 1
    %p50 = por %p48, %p49
    %p52 = scmp.ne.s32.totalorder %s37, %s51
    %p53 = scmp.eq.s32.totalorder %s20, 0
    %p54 = por %p52, %p53
    %s56 = sadd.s32 %s55, 1
    %p59 = scmp.eq.s32.totalorder %s14, 1
    %p60 = scmp.ne.s32.totalorder %s55, %s57
    %p61 = scmp.eq.s32.totalorder %s14, 0
    %p62 = por %p60, %p61
    %p63 = scmp.ne.s32.totalorder %s55, %s57
    %p64 = scmp.eq.s32.totalorder %s19, 1
    %p65 = por %p63, %p64
    %p66 = scmp.ne.s32.totalorder %s57, %s58
    %p67 = scmp.eq.s32.totalorder %s19, 0
    %p68 = por %p66, %p67
    %p69 = scmp.ne.s32.totalorder %s57, %s58
    %p70 = scmp.eq.s32.totalorder %s20, 1
    %p71 = por %p69, %p70
    %p73 = scmp.ne.s32.totalorder %s58, %s72
    %p74 = scmp.eq.s32.totalorder %s20, 0
    %p75 = por %p73, %p74
    %s77 = sadd.s32 %s76, 1
    %p80 = scmp.eq.s32.totalorder %s14, 1
    %p81 = scmp.ne.s32.totalorder %s76, %s78
    %p82 = scmp.eq.s32.totalorder %s14, 0
    %p83 = por %p81, %p82
    %p84 = scmp.ne.s32.totalorder %s76, %s78
    %p85 = scmp.eq.s32.totalorder %s19, 1
    %p86 = por %p84, %p85
    %p87 = scmp.ne.s32.totalorder %s78, %s79
    %p88 = scmp.eq.s32.totalorder %s19, 0
    %p89 = por %p87, %p88
    %p90 = scmp.ne.s32.totalorder %s78, %s79
    %p91 = scmp.eq.s32.totalorder %s20, 1
    %p92 = por %p90, %p91
    %p94 = scmp.ne.s32.totalorder %s79, %s93
    %p95 = scmp.eq.s32.totalorder %s20, 0
    %p96 = por %p94, %p95
    %s98 = sadd.s32 %s97, 1
    %p101 = scmp.eq.s32.totalorder %s14, 1
    %p102 = scmp.ne.s32.totalorder %s97, %s99
    %p103 = scmp.eq.s32.totalorder %s14, 0
    %p104 = por %p102, %p103
    %p105 = scmp.ne.s32.totalorder %s97, %s99
    %p106 = scmp.eq.s32.totalorder %s19, 1
    %p107 = por %p105, %p106
    %p108 = scmp.ne.s32.totalorder %s99, %s100
    %p109 = scmp.eq.s32.totalorder %s19, 0
    %p110 = por %p108, %p109
    %p111 = scmp.ne.s32.totalorder %s99, %s100
    %p112 = scmp.eq.s32.totalorder %s20, 1
    %p113 = por %p111, %p112
    %p115 = scmp.ne.s32.totalorder %s100, %s114
    %p116 = scmp.eq.s32.totalorder %s20, 0
    %p117 = por %p115, %p116
    %s119 = sadd.s32 %s118, 1
    %p122 = scmp.eq.s32.totalorder %s14, 1
    %p123 = scmp.ne.s32.totalorder %s118, %s120
    %p124 = scmp.eq.s32.totalorder %s14, 0
    %p125 = por %p123, %p124
    %p126 = scmp.ne.s32.totalorder %s118, %s120
    %p127 = scmp.eq.s32.totalorder %s19, 1
    %p128 = por %p126, %p127
    %p129 = scmp.ne.s32.totalorder %s120, %s121
    %p130 = scmp.eq.s32.totalorder %s19, 0
    %p131 = por %p129, %p130
    %p132 = scmp.ne.s32.totalorder %s120, %s121
    %p133 = scmp.eq.s32.totalorder %s20, 1
    %p134 = por %p132, %p133
    %p136 = scmp.ne.s32.totalorder %s121, %s135
    %p137 = scmp.eq.s32.totalorder %s20, 0
    %p138 = por %p136, %p137
    %s140 = sadd.s32 %s139, 1
    %p143 = scmp.eq.s32.totalorder %s14, 1
    %p144 = scmp.ne.s32.totalorder %s139, %s141
    %p145 = scmp.eq.s32.totalorder %s14, 0
    %p146 = por %p144, %p145
    %p147 = scmp.ne.s32.totalorder %s139, %s141
    %p148 = scmp.eq.s32.totalorder %s19, 1
    %p149 = por %p147, %p148
    %p150 = scmp.ne.s32.totalorder %s141, %s142
    %p151 = scmp.eq.s32.totalorder %s19, 0
    %p152 = por %p150, %p151
    %p153 = scmp.ne.s32.totalorder %s141, %s142
    %p154 = scmp.eq.s32.totalorder %s20, 1
    %p155 = por %p153, %p154
    %p157 = scmp.ne.s32.totalorder %s142, %s156
    %p158 = scmp.eq.s32.totalorder %s20, 0
    %p159 = por %p157, %p158
    %s160 = ssub.s32 %s22, %s29
    %p161 = scmp.eq.s32.totalorder %s160, 0
    %s163 = sadd.s32 %s162, 1
    %s164 = scalar_select %p161, %s162, %s163
    %p167 = pneg %p161
    %p168 = scmp.eq.s32.totalorder %s14, 1
    %p169 = por %p167, %p168
    %p170 = scmp.ne.s32.totalorder %s162, %s165
    %p171 = scmp.eq.s32.totalorder %s14, 0
    %p172 = por %p170, %p171
    %p173 = scmp.ne.s32.totalorder %s162, %s165
    %p174 = scmp.eq.s32.totalorder %s19, 1
    %p175 = por %p173, %p174
    %p176 = scmp.ne.s32.totalorder %s165, %s166
    %p177 = scmp.eq.s32.totalorder %s19, 0
    %p178 = por %p176, %p177
    %p179 = scmp.ne.s32.totalorder %s165, %s166
    %p180 = scmp.eq.s32.totalorder %s20, 1
    %p181 = por %p179, %p180
    %p183 = scmp.ne.s32.totalorder %s166, %s182
    %p184 = scmp.eq.s32.totalorder %s20, 0
    %p185 = por %p183, %p184
    %s187 = sadd.s32 %s186, 1
    %p190 = scmp.eq.s32.totalorder %s14, 1
    %p191 = scmp.ne.s32.totalorder %s186, %s188
    %p192 = scmp.eq.s32.totalorder %s14, 0
    %p193 = por %p191, %p192
    %p194 = scmp.ne.s32.totalorder %s186, %s188
    %p195 = scmp.eq.s32.totalorder %s19, 1
    %p196 = por %p194, %p195
    %p197 = scmp.ne.s32.totalorder %s188, %s189
    %p198 = scmp.eq.s32.totalorder %s19, 0
    %p199 = por %p197, %p198
    %p200 = scmp.ne.s32.totalorder %s188, %s189
    %p201 = scmp.eq.s32.totalorder %s20, 1
    %p202 = por %p200, %p201
    %p204 = scmp.ne.s32.totalorder %s189, %s203
    %p205 = scmp.eq.s32.totalorder %s20, 0
    %p206 = por %p204, %p205
    %p207 = scmp.le.s32.totalorder 1, %s14
    %p208 = scmp.lt.s32.totalorder %s14, 3
    %p209 = pnand %p207, %p208
    %p210 = pneg %p209
    // Predicated region
    $region9: #{ggsnn_forward.1} parent=5 // pred_check
      _
    $region10: #{ggsnn_forward.1} parent=5 // pred_check_branch
      %212 = sbr.rel (%p209) target = $region12
    $region11: #{ggsnn_forward.1} parent=5 // pred_region
      %s213 = ssub.s32 %s14, 1
      // Predicated region
      $region13: #{ggsnn_forward.1} parent=11 // pred_check
        %p214 = pneg %p47
      $region14: #{ggsnn_forward.1} parent=11 // pred_check_branch
        %216 = sbr.rel (%p214) target = $region16
      $region15: #{ggsnn_forward.1} parent=11 // pred_region
        _
      $region16: #{ggsnn_forward.1} parent=11 // pred_fallthru
        _
      // Predicated region
      $region17: #{ggsnn_forward.1} parent=11 // pred_check
        %p217 = pneg %p68
      $region18: #{ggsnn_forward.1} parent=11 // pred_check_branch
        %219 = sbr.rel (%p217) target = $region20
      $region19: #{ggsnn_forward.1} parent=11 // pred_region
        _
      $region20: #{ggsnn_forward.1} parent=11 // pred_fallthru
        _
      // Predicated region
      $region21: #{ggsnn_forward.1} parent=11 // pred_check
        %p220 = pneg %p89
      $region22: #{ggsnn_forward.1} parent=11 // pred_check_branch
        %222 = sbr.rel (%p220) target = $region24
      $region23: #{ggsnn_forward.1} parent=11 // pred_region
        _
      $region24: #{ggsnn_forward.1} parent=11 // pred_fallthru
        _
      // Predicated region
      $region25: #{ggsnn_forward.1} parent=11 // pred_check
        %p223 = pneg %p110
      $region26: #{ggsnn_forward.1} parent=11 // pred_check_branch
        %225 = sbr.rel (%p223) target = $region28
      $region27: #{ggsnn_forward.1} parent=11 // pred_region
        _
      $region28: #{ggsnn_forward.1} parent=11 // pred_fallthru
        _
      // Predicated region
      $region29: #{ggsnn_forward.1} parent=11 // pred_check
        %p226 = pneg %p131
      $region30: #{ggsnn_forward.1} parent=11 // pred_check_branch
        %228 = sbr.rel (%p226) target = $region32
      $region31: #{ggsnn_forward.1} parent=11 // pred_region
        _
      $region32: #{ggsnn_forward.1} parent=11 // pred_fallthru
        _
      // Predicated region
      $region33: #{ggsnn_forward.1} parent=11 // pred_check
        %p229 = pneg %p152
      $region34: #{ggsnn_forward.1} parent=11 // pred_check_branch
        %231 = sbr.rel (%p229) target = $region36
      $region35: #{ggsnn_forward.1} parent=11 // pred_region
        _
      $region36: #{ggsnn_forward.1} parent=11 // pred_fallthru
        _
      // Predicated region
      $region37: #{ggsnn_forward.1} parent=11 // pred_check
        %p232 = pneg %p178
      $region38: #{ggsnn_forward.1} parent=11 // pred_check_branch
        %234 = sbr.rel (%p232) target = $region40
      $region39: #{ggsnn_forward.1} parent=11 // pred_region
        %s235 = smul.u32 2, %s24
        %p236 = scmp.lt.s32.totalorder %s235, 1
        %s237 = scalar_select %p236, %s235, 1
        %s238 = smul.addr %s237, 8
        %s239 = scalar_lea.vmem %s7, %s238
        %s240 = smul.u32 2, %s24
      $region40: #{ggsnn_forward.1} parent=11 // pred_fallthru
        _
    $region12: #{ggsnn_forward.1} parent=5 // pred_fallthru
      _
    %p241 = scmp.lt.s32.totalorder %s14, 2
    // Predicated region
    $region41: #{ggsnn_forward.1} parent=5 // pred_check
      %p242 = pneg %p241
    $region42: #{ggsnn_forward.1} parent=5 // pred_check_branch
      %244 = sbr.rel (%p242) target = $region44
    $region43: #{ggsnn_forward.1} parent=5 // pred_region
      _
    $region44: #{ggsnn_forward.1} parent=5 // pred_fallthru
      _
    %p245 = scmp.le.s32.totalorder 1, %s14
    %p246 = scmp.lt.s32.totalorder %s14, 3
    %p247 = pnand %p245, %p246
    %p248 = pneg %p247
    // Predicated region
    $region45: #{ggsnn_forward.1} parent=5 // pred_check
      _
    $region46: #{ggsnn_forward.1} parent=5 // pred_check_branch
      %250 = sbr.rel (%p247) target = $region48
    $region47: #{ggsnn_forward.1} parent=5 // pred_region
      %s251 = ssub.s32 %s14, 1
      %p252 = pneg %p47
      %p253 = pneg %p44
      %p254 = pneg %p68
      %p255 = pneg %p65
      %p256 = pneg %p89
      %p257 = pneg %p86
      %p258 = pneg %p110
      %p259 = pneg %p107
      %p260 = pneg %p131
      %p261 = pneg %p128
      %p262 = pneg %p152
      %p263 = pneg %p149
      %s264 = smul.u32 2, %s24
      %p265 = scmp.lt.s32.totalorder %s264, 1
      %s266 = scalar_select %p265, %s264, 1
      %s267 = smul.addr %s266, 8
      %s268 = scalar_lea.vmem %s7, %s267
      %p269 = pneg %p178
      %p270 = pneg %p175
      %p271 = pneg %p199
      %p272 = pneg %p196
      %s273 = smul.u32 2, %s24
      %p274 = scmp.lt.s32.totalorder %s273, 1
      %s275 = scalar_select %p274, %s273, 1
      %s276 = smul.addr %s275, 8
      %s277 = scalar_lea.vmem %s7, %s276
      %s278 = smul.u32 2, %s24
      %p280 = scmp.eq.s32.totalorder %s23, 0
      %p281 = scmp.eq.s32.totalorder %s24, 0
      %p282 = pnand %p280, %p281
      %p283 = pneg %p282
      // Predicated region
      $region49: #{ggsnn_forward.1} parent=47 // pred_check
        _
      $region50: #{ggsnn_forward.1} parent=47 // pred_check_branch
        %285 = sbr.rel (%p282) target = $region52
      $region51: #{ggsnn_forward.1} parent=47 // pred_region
        %286 = vst [vmem:[#allocation4] sm:$0xff] 0.0
        %p288 = scmp.lt.u32.totalorder 8, 8
        %p289 = pneg %p288
        // Predicated region
        $region53: #{ggsnn_forward.1} parent=51 // pred_check
          _
        $region54: #{ggsnn_forward.1} parent=51 // pred_check_branch
          %291 = sbr.rel (%p288) target = $region56
        $region55: #{ggsnn_forward.1} parent=51 // pred_region
          %s306 = sand.u32 8, 7
          %p307 = scmp.eq.s32.totalorder %s306, 0
          // Predicated region
          $region68: #{ggsnn_forward.1} parent=55 // pred_check
            %p308 = pneg %p307
          $region69: #{ggsnn_forward.1} parent=55 // pred_check_branch
            %310 = sbr.rel (%p308) target = $region71
          $region70: #{ggsnn_forward.1} parent=55 // pred_region
            loop: start=0, step=1, limit=1
            $region72: #{ggsnn_forward.1} parent=70 // loop_pre_header
              _
            $region73: #{ggsnn_forward.1} parent=70 // loop_header
              %s312 = sphi 0, %s316
              %p313 = scmp.ge.s32.totalorder %s312, 1
              %s317 = sphi %s0, %s0
              %s318 = sphi [#allocation2], [#allocation2]
            $region74: #{ggsnn_forward.1} parent=70 // loop_header_branch
              %315 = sbr.rel (%p313) target = $region78
            $region75: #{ggsnn_forward.1} parent=70 // loop_body
              %v319 = vld [vmem:[%s317] sm:$0xff]
              %320 = vst [vmem:[%s318] sm:$0xff] %v319
            $region76: #{ggsnn_forward.1} parent=70 // loop_footer
              %s316 = sadd.s32 1, %s312
            $region77: #{ggsnn_forward.1} parent=70 // loop_footer_branch
              %311 = sbr.rel target = $region73
            $region78: #{ggsnn_forward.1} parent=70 // loop_exit
              _
          $region71: #{ggsnn_forward.1} parent=55 // pred_fallthru
            _
          %p321 = pneg %p307
          // Predicated region
          $region79: #{ggsnn_forward.1} parent=55 // pred_check
            _
          $region80: #{ggsnn_forward.1} parent=55 // pred_check_branch
            %323 = sbr.rel (%p307) target = $region82
          $region81: #{ggsnn_forward.1} parent=55 // pred_region
            %s324 = sand.u32 8, 7
          $region82: #{ggsnn_forward.1} parent=55 // pred_fallthru
            _
        $region56: #{ggsnn_forward.1} parent=51 // pred_fallthru
          _
        // Predicated region
        $region57: #{ggsnn_forward.1} parent=51 // pred_check
          %p292 = pneg %p288
        $region58: #{ggsnn_forward.1} parent=51 // pred_check_branch
          %294 = sbr.rel (%p292) target = $region60
        $region59: #{ggsnn_forward.1} parent=51 // pred_region
          %s295 = sshllo.u32 0, 8
          loop: start=0, step=1, limit=1
          $region61: #{ggsnn_forward.1} parent=59 // loop_pre_header
            _
          $region62: #{ggsnn_forward.1} parent=59 // loop_header
            %s297 = sphi 0, %s301
            %p298 = scmp.ge.s32.totalorder %s297, 1
            %s302 = sphi %s0, %s0
            %s303 = sphi [#allocation2], [#allocation2]
          $region63: #{ggsnn_forward.1} parent=59 // loop_header_branch
            %300 = sbr.rel (%p298) target = $region67
          $region64: #{ggsnn_forward.1} parent=59 // loop_body
            %v304 = vld [vmem:[%s302] sm:%s295]
            %305 = vst [vmem:[%s303] sm:%s295] %v304
          $region65: #{ggsnn_forward.1} parent=59 // loop_footer
            %s301 = sadd.s32 1, %s297
          $region66: #{ggsnn_forward.1} parent=59 // loop_footer_branch
            %296 = sbr.rel target = $region62
          $region67: #{ggsnn_forward.1} parent=59 // loop_exit
            _
        $region60: #{ggsnn_forward.1} parent=51 // pred_fallthru
          _
        // Predicated region
        $region83: #{ggsnn_forward.1} parent=51 // pred_check
          _
        $region84: #{ggsnn_forward.1} parent=51 // pred_check_branch
          %327 = sbr.rel (0) target = $region86
        $region85: #{ggsnn_forward.1} parent=51 // pred_region
          %328 = vsyncadd [#allocation5], 128
        $region86: #{ggsnn_forward.1} parent=51 // pred_fallthru
          _
        %s329 = smul.u32 4, 2
        %s330 = smul.u32 %s329, 1
        %s331 = sshll.u32 %s330, 4
        %332 = dma.done [#allocation5], %s331
      $region52: #{ggsnn_forward.1} parent=47 // pred_fallthru
        _
      %s333 = smul.u32 %s24, 16
      %s334 = sshra.s32 %s333, 4
      %s335 = sand.u32 %s333, 15
      %s336 = smul.addr %s334, 8
      %s337 = scalar_lea.vmem [#allocation2], %s336
      %v338 = vld [vmem:[%s337] sm:$0xff]
      // Predicated region
      $region87: #{ggsnn_forward.1} parent=47 // pred_check
        %p339 = pneg %p280
      $region88: #{ggsnn_forward.1} parent=47 // pred_check_branch
        %341 = sbr.rel (%p339) target = $region90
      $region89: #{ggsnn_forward.1} parent=47 // pred_region
        %v342 = vld [vmem:[%s1] sm:$0xf]
        %v343 = vld [vmem:[%s1 + $0x4] sm:$0xf]
        %v344 = vld [vmem:[%s3] sm:$0x1]
        %v346 = vlaneseq
        %v347 = vshrl.u32 %v346, 7
        %v348 = vsub.s32 0, %v347
        %v349 = vrot.slane %v344, %v348
        %v353 = vunpack.c.l.b16 %v342
        %v354 = vunpack.c.l.b16 %v343
        %v355 = vpack.c.b16 %v354, %v353
        %vm357 = vcmask 130048
        %v359 = vsel %vm357, %v338, 0
        %361 = vmatprep.subr.bf16.mxu0 0
        %362 = vmatpush1.bf16.msra.mxu0 %v355
        %363 = vmatprep.subr.bf16.mxu0 0
        %364 = vmatpush1.bf16.msra.mxu0 0
        %365 = vmatprep.subr.bf16.mxu0 0
        %366 = vmatpush1.bf16.msra.mxu0 0
        %367 = vmatprep.subr.bf16.mxu0 0
        %368 = vmatpush1.bf16.msra.mxu0 0
        %369 = vmatprep.subr.bf16.mxu0 0
        %370 = vmatpush1.bf16.msra.mxu0 0
        %371 = vmatprep.subr.bf16.mxu0 0
        %372 = vmatpush1.bf16.msra.mxu0 0
        %373 = vmatprep.subr.bf16.mxu0 0
        %374 = vmatpush1.bf16.msra.mxu0 0
        %375 = vmatprep.subr.bf16.mxu0 0
        %376 = vmatpush1.bf16.msra.mxu0 0
        %377 = vmatprep.subr.bf16.mxu0 0
        %378 = vmatpush1.bf16.msra.mxu0 0
        %379 = vmatprep.subr.bf16.mxu0 0
        %380 = vmatpush1.bf16.msra.mxu0 0
        %381 = vmatprep.subr.bf16.mxu0 0
        %382 = vmatpush1.bf16.msra.mxu0 0
        %383 = vmatprep.subr.bf16.mxu0 0
        %384 = vmatpush1.bf16.msra.mxu0 0
        %385 = vmatprep.subr.bf16.mxu0 0
        %386 = vmatpush1.bf16.msra.mxu0 0
        %387 = vmatprep.subr.bf16.mxu0 0
        %388 = vmatpush1.bf16.msra.mxu0 0
        %389 = vmatprep.subr.bf16.mxu0 0
        %390 = vmatpush1.bf16.msra.mxu0 0
        %391 = vmatprep.subr.bf16.mxu0 0
        %392 = vmatpush1.bf16.msra.mxu0 0
        %393 = vmatprep.mubr.bf16.mxu0 0
        %394 = vmatmul.mubr.bf16.gmra.mrb[0].mxu0 %v359
        %v395 = vpop.f32.mrb[0].mxu0
        %v396 = vadd.f32 %v349, %v395
        %v397 = vpop.f32.mrb[0].mxu0
        %v398 = vpop.f32.mrb[0].mxu0
        %v399 = vadd.f32 %v349, %v398
        %v400 = vpop.f32.mrb[0].mxu0
        %401 = vdwg.mxu0
        %v402 = vmax.f32 %v396, 0.0
        %v403 = vmax.f32 %v399, 0.0
        %v404 = vpack.c.bf16 %v403, %v402
        %v405 = vld [vmem:[%s2] sm:$0xf]
        %v406 = vld [vmem:[%s2 + $0x4] sm:$0xf]
        %v407 = vld [vmem:[%s2 + $0x8] sm:$0xf]
        %v408 = vld [vmem:[%s2 + $0xc] sm:$0xf]
        %v409 = vld [vmem:[%s2 + $0x10] sm:$0xf]
        %v410 = vld [vmem:[%s2 + $0x14] sm:$0xf]
        %v411 = vld [vmem:[%s2 + $0x18] sm:$0xf]
        %v412 = vld [vmem:[%s2 + $0x1c] sm:$0xf]
        %v413 = vld [vmem:[%s2 + $0x20] sm:$0xf]
        %v414 = vld [vmem:[%s2 + $0x24] sm:$0xf]
        %v415 = vld [vmem:[%s2 + $0x28] sm:$0xf]
        %v416 = vld [vmem:[%s2 + $0x2c] sm:$0xf]
        %v417 = vld [vmem:[%s2 + $0x30] sm:$0xf]
        %v418 = vld [vmem:[%s2 + $0x34] sm:$0xf]
        %v419 = vld [vmem:[%s2 + $0x38] sm:$0xf]
        %v420 = vld [vmem:[%s2 + $0x3c] sm:$0xf]
        %v437 = vunpack.c.l.b16 %v405
        %v438 = vunpack.c.l.b16 %v406
        %v439 = vunpack.c.l.b16 %v407
        %v440 = vunpack.c.l.b16 %v408
        %v441 = vunpack.c.l.b16 %v409
        %v442 = vunpack.c.l.b16 %v410
        %v443 = vunpack.c.l.b16 %v411
        %v444 = vunpack.c.l.b16 %v412
        %v445 = vunpack.c.l.b16 %v413
        %v446 = vunpack.c.l.b16 %v414
        %v447 = vunpack.c.l.b16 %v415
        %v448 = vunpack.c.l.b16 %v416
        %v449 = vunpack.c.l.b16 %v417
        %v450 = vunpack.c.l.b16 %v418
        %v451 = vunpack.c.l.b16 %v419
        %v452 = vunpack.c.l.b16 %v420
        %v453 = vpack.c.b16 %v438, %v437
        %v454 = vpack.c.b16 %v440, %v439
        %v455 = vpack.c.b16 %v442, %v441
        %v456 = vpack.c.b16 %v444, %v443
        %v457 = vpack.c.b16 %v446, %v445
        %v458 = vpack.c.b16 %v448, %v447
        %v459 = vpack.c.b16 %v450, %v449
        %v460 = vpack.c.b16 %v452, %v451
        %469 = vmatprep.subr.bf16.mxu0 0
        %470 = vmatpush1.bf16.msra.mxu0 %v453
        %471 = vmatprep.subr.bf16.mxu0 0
        %472 = vmatpush1.bf16.msra.mxu0 %v454
        %473 = vmatprep.subr.bf16.mxu0 0
        %474 = vmatpush1.bf16.msra.mxu0 %v455
        %475 = vmatprep.subr.bf16.mxu0 0
        %476 = vmatpush1.bf16.msra.mxu0 %v456
        %477 = vmatprep.subr.bf16.mxu0 0
        %478 = vmatpush1.bf16.msra.mxu0 %v457
        %479 = vmatprep.subr.bf16.mxu0 0
        %480 = vmatpush1.bf16.msra.mxu0 %v458
        %481 = vmatprep.subr.bf16.mxu0 0
        %482 = vmatpush1.bf16.msra.mxu0 %v459
        %483 = vmatprep.subr.bf16.mxu0 0
        %484 = vmatpush1.bf16.msra.mxu0 %v460
        %485 = vmatprep.subr.bf16.mxu0 0
        %486 = vmatpush1.bf16.msra.mxu0 0
        %487 = vmatprep.subr.bf16.mxu0 0
        %488 = vmatpush1.bf16.msra.mxu0 0
        %489 = vmatprep.subr.bf16.mxu0 0
        %490 = vmatpush1.bf16.msra.mxu0 0
        %491 = vmatprep.subr.bf16.mxu0 0
        %492 = vmatpush1.bf16.msra.mxu0 0
        %493 = vmatprep.subr.bf16.mxu0 0
        %494 = vmatpush1.bf16.msra.mxu0 0
        %495 = vmatprep.subr.bf16.mxu0 0
        %496 = vmatpush1.bf16.msra.mxu0 0
        %497 = vmatprep.subr.bf16.mxu0 0
        %498 = vmatpush1.bf16.msra.mxu0 0
        %499 = vmatprep.subr.bf16.mxu0 0
        %500 = vmatpush1.bf16.msra.mxu0 0
        %501 = vmatprep.mubr.bf16.mxu0 0
        %502 = vmatmul.mubr.bf16.gmra.mrb[0].mxu0 %v404
        %v503 = vpop.f32.mrb[0].mxu0
        %v504 = vadd.f32 0.0, %v503
        %v505 = vpop.f32.mrb[0].mxu0
        %v506 = vpop.f32.mrb[0].mxu0
        %v507 = vadd.f32 0.0, %v506
        %v508 = vpop.f32.mrb[0].mxu0
        %509 = vdwg.mxu0
        %v510 = vpack.c.bf16 %v507, %v504
        %s511 = smul.addr %s334, 8
        %s512 = scalar_lea.vmem [#allocation3], %s511
        %513 = vst [vmem:[%s512] sm:$0xff] %v510
      $region90: #{ggsnn_forward.1} parent=47 // pred_fallthru
        _
      %p514 = scmp.eq.s32.totalorder %s23, 1
      // Predicated region
      $region91: #{ggsnn_forward.1} parent=47 // pred_check
        %p515 = pneg %p514
      $region92: #{ggsnn_forward.1} parent=47 // pred_check_branch
        %517 = sbr.rel (%p515) target = $region94
      $region93: #{ggsnn_forward.1} parent=47 // pred_region
        %v518 = vld [vmem:[#allocation3] sm:$0xff]
        %v519 = vld [vmem:[%s4] sm:$0x1]
        %v521 = vlaneseq
        %v522 = vshrl.u32 %v521, 7
        %v523 = vsub.s32 0, %v522
        %v524 = vrot.slane %v519, %v523
        %vm526 = vcmask 130048
        %v528 = vsel %vm526, %v338, 0
        %530 = vmatprep.subr.bf16.mxu0 0
        %531 = vmatpush1.bf16.msra.mxu0 %v518
        %532 = vmatprep.subr.bf16.mxu0 0
        %533 = vmatpush1.bf16.msra.mxu0 0
        %534 = vmatprep.subr.bf16.mxu0 0
        %535 = vmatpush1.bf16.msra.mxu0 0
        %536 = vmatprep.subr.bf16.mxu0 0
        %537 = vmatpush1.bf16.msra.mxu0 0
        %538 = vmatprep.subr.bf16.mxu0 0
        %539 = vmatpush1.bf16.msra.mxu0 0
        %540 = vmatprep.subr.bf16.mxu0 0
        %541 = vmatpush1.bf16.msra.mxu0 0
        %542 = vmatprep.subr.bf16.mxu0 0
        %543 = vmatpush1.bf16.msra.mxu0 0
        %544 = vmatprep.subr.bf16.mxu0 0
        %545 = vmatpush1.bf16.msra.mxu0 0
        %546 = vmatprep.subr.bf16.mxu0 0
        %547 = vmatpush1.bf16.msra.mxu0 0
        %548 = vmatprep.subr.bf16.mxu0 0
        %549 = vmatpush1.bf16.msra.mxu0 0
        %550 = vmatprep.subr.bf16.mxu0 0
        %551 = vmatpush1.bf16.msra.mxu0 0
        %552 = vmatprep.subr.bf16.mxu0 0
        %553 = vmatpush1.bf16.msra.mxu0 0
        %554 = vmatprep.subr.bf16.mxu0 0
        %555 = vmatpush1.bf16.msra.mxu0 0
        %556 = vmatprep.subr.bf16.mxu0 0
        %557 = vmatpush1.bf16.msra.mxu0 0
        %558 = vmatprep.subr.bf16.mxu0 0
        %559 = vmatpush1.bf16.msra.mxu0 0
        %560 = vmatprep.subr.bf16.mxu0 0
        %561 = vmatpush1.bf16.msra.mxu0 0
        %562 = vmatprep.mubr.bf16.mxu0 0
        %563 = vmatmul.mubr.bf16.gmra.mrb[0].mxu0 %v528
        %v564 = vpop.f32.mrb[0].mxu0
        %v565 = vadd.f32 %v524, %v564
        %v566 = vpop.f32.mrb[0].mxu0
        %v567 = vpop.f32.mrb[0].mxu0
        %v568 = vadd.f32 %v524, %v567
        %v569 = vpop.f32.mrb[0].mxu0
        %570 = vdwg.mxu0
        %v571 = vmax.f32 %v565, 0.0
        %v572 = vmax.f32 %v568, 0.0
        %v573 = vld [vmem:[%s277] sm:$0xff]
        %v574 = vld [vmem:[%s277 + $0x8] sm:$0xff]
        %v575 = vlaneseq
        %v576 = vand.u32 %v575, 127
        %v577 = vstv 0
        %v578 = vadd.s32 %v576, %v577
        %579 = vset.pattern.permute.xlu0 0
        %580 = vperm.xlu0 %579, %v573
        %v581 = vpop.permute.xlu0 %580
        %582 = vset.pattern.permute.xlu0 0
        %583 = vperm.xlu0 %582, %v574
        %v584 = vpop.permute.xlu0 %583
        %vm585 = vcmp.eq.s32.totalorder %v581, %v578
        %vm586 = vcmp.eq.s32.totalorder %v584, %v578
        %v587 = vsel %vm585, 1, 0
        %v588 = vsel %vm586, 1, 0
        %v589 = vcvt.s32.f32 %v587
        %v590 = vcvt.s32.f32 %v588
        %v593 = vcombine.high %v571, %v571
        %v595 = vunpack.c.l.s4 1966171168
        %v596 = vunpack.c.0.s8 %v595
        %v597 = vlaneseq
        %v598 = vshrl.u32 %v597, 7
        %v599 = vsub.s32 %v596, %v598
        %v600 = vrot.slane %v571, %v599
        %v602 = vunpack.c.l.s4 1966171168
        %v603 = vunpack.c.0.s8 %v602
        %v604 = vlaneseq
        %v605 = vshrl.u32 %v604, 7
        %v606 = vsub.s32 %v603, %v605
        %v607 = vrot.slane %v593, %v606
        %v608 = vcombine.high %v600, %v600
        %v609 = vcombine.high %v607, %v607
        %v611 = vunpack.c.l.s4 1966171168
        %v612 = vunpack.c.0.s8 %v611
        %v613 = vlaneseq
        %v614 = vshrl.u32 %v613, 7
        %v615 = vsub.s32 %v612, %v614
        %v616 = vrot.slane %v600, %v615
        %v618 = vunpack.c.l.s4 1966171168
        %v619 = vunpack.c.0.s8 %v618
        %v620 = vlaneseq
        %v621 = vshrl.u32 %v620, 7
        %v622 = vsub.s32 %v619, %v621
        %v623 = vrot.slane %v607, %v622
        %v625 = vunpack.c.l.s4 1966171168
        %v626 = vunpack.c.0.s8 %v625
        %v627 = vlaneseq
        %v628 = vshrl.u32 %v627, 7
        %v629 = vsub.s32 %v626, %v628
        %v630 = vrot.slane %v608, %v629
        %v632 = vunpack.c.l.s4 1966171168
        %v633 = vunpack.c.0.s8 %v632
        %v634 = vlaneseq
        %v635 = vshrl.u32 %v634, 7
        %v636 = vsub.s32 %v633, %v635
        %v637 = vrot.slane %v609, %v636
        %v638 = vcombine.high %v616, %v616
        %v639 = vcombine.high %v623, %v623
        %v640 = vcombine.high %v630, %v630
        %v641 = vcombine.high %v637, %v637
        %v642 = vcombine.high %v572, %v572
        %v644 = vunpack.c.l.s4 1966171168
        %v645 = vunpack.c.0.s8 %v644
        %v646 = vlaneseq
        %v647 = vshrl.u32 %v646, 7
        %v648 = vsub.s32 %v645, %v647
        %v649 = vrot.slane %v572, %v648
        %v651 = vunpack.c.l.s4 1966171168
        %v652 = vunpack.c.0.s8 %v651
        %v653 = vlaneseq
        %v654 = vshrl.u32 %v653, 7
        %v655 = vsub.s32 %v652, %v654
        %v656 = vrot.slane %v642, %v655
        %v657 = vcombine.high %v649, %v649
        %v658 = vcombine.high %v656, %v656
        %v660 = vunpack.c.l.s4 1966171168
        %v661 = vunpack.c.0.s8 %v660
        %v662 = vlaneseq
        %v663 = vshrl.u32 %v662, 7
        %v664 = vsub.s32 %v661, %v663
        %v665 = vrot.slane %v649, %v664
        %v667 = vunpack.c.l.s4 1966171168
        %v668 = vunpack.c.0.s8 %v667
        %v669 = vlaneseq
        %v670 = vshrl.u32 %v669, 7
        %v671 = vsub.s32 %v668, %v670
        %v672 = vrot.slane %v656, %v671
        %v674 = vunpack.c.l.s4 1966171168
        %v675 = vunpack.c.0.s8 %v674
        %v676 = vlaneseq
        %v677 = vshrl.u32 %v676, 7
        %v678 = vsub.s32 %v675, %v677
        %v679 = vrot.slane %v657, %v678
        %v681 = vunpack.c.l.s4 1966171168
        %v682 = vunpack.c.0.s8 %v681
        %v683 = vlaneseq
        %v684 = vshrl.u32 %v683, 7
        %v685 = vsub.s32 %v682, %v684
        %v686 = vrot.slane %v658, %v685
        %v687 = vcombine.high %v665, %v665
        %v688 = vcombine.high %v672, %v672
        %v689 = vcombine.high %v679, %v679
        %v690 = vcombine.high %v686, %v686
        %v691 = vlaneseq
        %v692 = vshrl.u32 %v691, 7
        %v693 = vsub.s32 0, %v692
        %v694 = vrot.slane %v589, %v693
        %696 = vbcast.lane.b32.xlu0 %v694, 256
        %v697 = vpop.permute.xlu0 %696
        %v698 = vlaneseq
        %v699 = vshrl.u32 %v698, 7
        %v700 = vsub.s32 1, %v699
        %v701 = vrot.slane %v589, %v700
        %703 = vbcast.lane.b32.xlu0 %v701, 256
        %v704 = vpop.permute.xlu0 %703
        %v705 = vlaneseq
        %v706 = vshrl.u32 %v705, 7
        %v707 = vsub.s32 2, %v706
        %v708 = vrot.slane %v589, %v707
        %710 = vbcast.lane.b32.xlu0 %v708, 256
        %v711 = vpop.permute.xlu0 %710
        %v712 = vlaneseq
        %v713 = vshrl.u32 %v712, 7
        %v714 = vsub.s32 3, %v713
        %v715 = vrot.slane %v589, %v714
        %717 = vbcast.lane.b32.xlu0 %v715, 256
        %v718 = vpop.permute.xlu0 %717
        %v719 = vlaneseq
        %v720 = vshrl.u32 %v719, 7
        %v721 = vsub.s32 4, %v720
        %v722 = vrot.slane %v589, %v721
        %724 = vbcast.lane.b32.xlu0 %v722, 256
        %v725 = vpop.permute.xlu0 %724
        %v726 = vlaneseq
        %v727 = vshrl.u32 %v726, 7
        %v728 = vsub.s32 5, %v727
        %v729 = vrot.slane %v589, %v728
        %731 = vbcast.lane.b32.xlu0 %v729, 256
        %v732 = vpop.permute.xlu0 %731
        %v733 = vlaneseq
        %v734 = vshrl.u32 %v733, 7
        %v735 = vsub.s32 6, %v734
        %v736 = vrot.slane %v589, %v735
        %738 = vbcast.lane.b32.xlu0 %v736, 256
        %v739 = vpop.permute.xlu0 %738
        %v740 = vlaneseq
        %v741 = vshrl.u32 %v740, 7
        %v742 = vsub.s32 7, %v741
        %v743 = vrot.slane %v589, %v742
        %745 = vbcast.lane.b32.xlu0 %v743, 256
        %v746 = vpop.permute.xlu0 %745
        %v747 = vlaneseq
        %v748 = vshrl.u32 %v747, 7
        %v749 = vsub.s32 0, %v748
        %v750 = vrot.slane %v590, %v749
        %752 = vbcast.lane.b32.xlu0 %v750, 256
        %v753 = vpop.permute.xlu0 %752
        %v754 = vlaneseq
        %v755 = vshrl.u32 %v754, 7
        %v756 = vsub.s32 1, %v755
        %v757 = vrot.slane %v590, %v756
        %759 = vbcast.lane.b32.xlu0 %v757, 256
        %v760 = vpop.permute.xlu0 %759
        %v761 = vlaneseq
        %v762 = vshrl.u32 %v761, 7
        %v763 = vsub.s32 2, %v762
        %v764 = vrot.slane %v590, %v763
        %766 = vbcast.lane.b32.xlu0 %v764, 256
        %v767 = vpop.permute.xlu0 %766
        %v768 = vlaneseq
        %v769 = vshrl.u32 %v768, 7
        %v770 = vsub.s32 3, %v769
        %v771 = vrot.slane %v590, %v770
        %773 = vbcast.lane.b32.xlu0 %v771, 256
        %v774 = vpop.permute.xlu0 %773
        %v775 = vlaneseq
        %v776 = vshrl.u32 %v775, 7
        %v777 = vsub.s32 4, %v776
        %v778 = vrot.slane %v590, %v777
        %780 = vbcast.lane.b32.xlu0 %v778, 256
        %v781 = vpop.permute.xlu0 %780
        %v782 = vlaneseq
        %v783 = vshrl.u32 %v782, 7
        %v784 = vsub.s32 5, %v783
        %v785 = vrot.slane %v590, %v784
        %787 = vbcast.lane.b32.xlu0 %v785, 256
        %v788 = vpop.permute.xlu0 %787
        %v789 = vlaneseq
        %v790 = vshrl.u32 %v789, 7
        %v791 = vsub.s32 6, %v790
        %v792 = vrot.slane %v590, %v791
        %794 = vbcast.lane.b32.xlu0 %v792, 256
        %v795 = vpop.permute.xlu0 %794
        %v796 = vlaneseq
        %v797 = vshrl.u32 %v796, 7
        %v798 = vsub.s32 7, %v797
        %v799 = vrot.slane %v590, %v798
        %801 = vbcast.lane.b32.xlu0 %v799, 256
        %v802 = vpop.permute.xlu0 %801
        %v803 = vlaneseq
        %v804 = vshrl.u32 %v803, 7
        %v805 = vsub.s32 0, %v804
        %v806 = vrot.slane %v616, %v805
        %v807 = vlaneseq
        %v808 = vshrl.u32 %v807, 7
        %v809 = vsub.s32 0, %v808
        %v810 = vrot.slane %v630, %v809
        %v811 = vlaneseq
        %v812 = vshrl.u32 %v811, 7
        %v813 = vsub.s32 0, %v812
        %v814 = vrot.slane %v638, %v813
        %v815 = vlaneseq
        %v816 = vshrl.u32 %v815, 7
        %v817 = vsub.s32 0, %v816
        %v818 = vrot.slane %v640, %v817
        %v819 = vlaneseq
        %v820 = vshrl.u32 %v819, 7
        %v821 = vsub.s32 0, %v820
        %v822 = vrot.slane %v623, %v821
        %v823 = vlaneseq
        %v824 = vshrl.u32 %v823, 7
        %v825 = vsub.s32 0, %v824
        %v826 = vrot.slane %v637, %v825
        %v827 = vlaneseq
        %v828 = vshrl.u32 %v827, 7
        %v829 = vsub.s32 0, %v828
        %v830 = vrot.slane %v639, %v829
        %v831 = vlaneseq
        %v832 = vshrl.u32 %v831, 7
        %v833 = vsub.s32 0, %v832
        %v834 = vrot.slane %v641, %v833
        %v835 = vlaneseq
        %v836 = vshrl.u32 %v835, 7
        %v837 = vsub.s32 0, %v836
        %v838 = vrot.slane %v665, %v837
        %v839 = vlaneseq
        %v840 = vshrl.u32 %v839, 7
        %v841 = vsub.s32 0, %v840
        %v842 = vrot.slane %v679, %v841
        %v843 = vlaneseq
        %v844 = vshrl.u32 %v843, 7
        %v845 = vsub.s32 0, %v844
        %v846 = vrot.slane %v687, %v845
        %v847 = vlaneseq
        %v848 = vshrl.u32 %v847, 7
        %v849 = vsub.s32 0, %v848
        %v850 = vrot.slane %v689, %v849
        %v851 = vlaneseq
        %v852 = vshrl.u32 %v851, 7
        %v853 = vsub.s32 0, %v852
        %v854 = vrot.slane %v672, %v853
        %v855 = vlaneseq
        %v856 = vshrl.u32 %v855, 7
        %v857 = vsub.s32 0, %v856
        %v858 = vrot.slane %v686, %v857
        %v859 = vlaneseq
        %v860 = vshrl.u32 %v859, 7
        %v861 = vsub.s32 0, %v860
        %v862 = vrot.slane %v688, %v861
        %v863 = vlaneseq
        %v864 = vshrl.u32 %v863, 7
        %v865 = vsub.s32 0, %v864
        %v866 = vrot.slane %v690, %v865
        %v883 = vmul.f32 %v806, %v697
        %v884 = vmul.f32 %v810, %v704
        %v885 = vmul.f32 %v814, %v711
        %v886 = vmul.f32 %v818, %v718
        %v887 = vmul.f32 %v822, %v725
        %v888 = vmul.f32 %v826, %v732
        %v889 = vmul.f32 %v830, %v739
        %v890 = vmul.f32 %v834, %v746
        %v891 = vmul.f32 %v838, %v753
        %v892 = vmul.f32 %v842, %v760
        %v893 = vmul.f32 %v846, %v767
        %v894 = vmul.f32 %v850, %v774
        %v895 = vmul.f32 %v854, %v781
        %v896 = vmul.f32 %v858, %v788
        %v897 = vmul.f32 %v862, %v795
        %v898 = vmul.f32 %v866, %v802
        %v899 = vmax.f32 %v883, %v887
        %v900 = vmax.f32 %v884, %v888
        %v901 = vmax.f32 %v885, %v889
        %v902 = vmax.f32 %v886, %v890
        %v903 = vmax.f32 %v899, %v891
        %v904 = vmax.f32 %v900, %v892
        %v905 = vmax.f32 %v901, %v893
        %v906 = vmax.f32 %v902, %v894
        %v907 = vmax.f32 %v903, %v895
        %v908 = vmax.f32 %v904, %v896
        %v909 = vmax.f32 %v905, %v897
        %v910 = vmax.f32 %v906, %v898
        %v911 = vmax.f32 %v907, %v908
        %v912 = vmax.f32 %v909, %v910
        %v913 = vmax.f32 %v911, %v912
        %v914 = vld [vmem:[#allocation4] sm:$0xff]
        %v915 = vmax.f32 %v914, %v913
        %916 = vst [vmem:[#allocation4] sm:$0xff] %v915
      $region94: #{ggsnn_forward.1} parent=47 // pred_fallthru
        _
      %p917 = pnand %p514, %p281
      %p918 = pneg %p917
      // Predicated region
      $region95: #{ggsnn_forward.1} parent=47 // pred_check
        _
      $region96: #{ggsnn_forward.1} parent=47 // pred_check_branch
        %920 = sbr.rel (%p917) target = $region98
      $region97: #{ggsnn_forward.1} parent=47 // pred_region
        %v921 = vld [vmem:[#allocation4] sm:$0xff]
        %v922 = vpack.c.bf16 %v921, %v921
        %v923 = vld [vmem:[%s5] sm:$0xf]
        %v924 = vld [vmem:[%s5 + $0x4] sm:$0xf]
        %v925 = vld [vmem:[%s5 + $0x8] sm:$0xf]
        %v926 = vld [vmem:[%s5 + $0xc] sm:$0xf]
        %v927 = vld [vmem:[%s5 + $0x10] sm:$0xf]
        %v928 = vld [vmem:[%s5 + $0x14] sm:$0xf]
        %v929 = vld [vmem:[%s5 + $0x18] sm:$0xf]
        %v930 = vld [vmem:[%s5 + $0x1c] sm:$0xf]
        %v931 = vld [vmem:[%s5 + $0x20] sm:$0xf]
        %v932 = vld [vmem:[%s5 + $0x24] sm:$0xf]
        %v933 = vld [vmem:[%s5 + $0x28] sm:$0xf]
        %v934 = vld [vmem:[%s5 + $0x2c] sm:$0xf]
        %v935 = vld [vmem:[%s5 + $0x30] sm:$0xf]
        %v936 = vld [vmem:[%s5 + $0x34] sm:$0xf]
        %v937 = vld [vmem:[%s5 + $0x38] sm:$0xf]
        %v938 = vld [vmem:[%s5 + $0x3c] sm:$0xf]
        %v939 = vld [vmem:[%s6] sm:$0x1]
        %v941 = vlaneseq
        %v942 = vshrl.u32 %v941, 7
        %v943 = vsub.s32 0, %v942
        %v944 = vrot.slane %v939, %v943
        %v962 = vunpack.c.l.b16 %v923
        %v963 = vunpack.c.l.b16 %v924
        %v964 = vunpack.c.l.b16 %v925
        %v965 = vunpack.c.l.b16 %v926
        %v966 = vunpack.c.l.b16 %v927
        %v967 = vunpack.c.l.b16 %v928
        %v968 = vunpack.c.l.b16 %v929
        %v969 = vunpack.c.l.b16 %v930
        %v970 = vunpack.c.l.b16 %v931
        %v971 = vunpack.c.l.b16 %v932
        %v972 = vunpack.c.l.b16 %v933
        %v973 = vunpack.c.l.b16 %v934
        %v974 = vunpack.c.l.b16 %v935
        %v975 = vunpack.c.l.b16 %v936
        %v976 = vunpack.c.l.b16 %v937
        %v977 = vunpack.c.l.b16 %v938
        %v978 = vpack.c.b16 %v963, %v962
        %v979 = vpack.c.b16 %v965, %v964
        %v980 = vpack.c.b16 %v967, %v966
        %v981 = vpack.c.b16 %v969, %v968
        %v982 = vpack.c.b16 %v971, %v970
        %v983 = vpack.c.b16 %v973, %v972
        %v984 = vpack.c.b16 %v975, %v974
        %v985 = vpack.c.b16 %v977, %v976
        %994 = vmatprep.subr.bf16.mxu0 0
        %995 = vmatpush1.bf16.msra.mxu0 %v978
        %996 = vmatprep.subr.bf16.mxu0 0
        %997 = vmatpush1.bf16.msra.mxu0 %v979
        %998 = vmatprep.subr.bf16.mxu0 0
        %999 = vmatpush1.bf16.msra.mxu0 %v980
        %1000 = vmatprep.subr.bf16.mxu0 0
        %1001 = vmatpush1.bf16.msra.mxu0 %v981
        %1002 = vmatprep.subr.bf16.mxu0 0
        %1003 = vmatpush1.bf16.msra.mxu0 %v982
        %1004 = vmatprep.subr.bf16.mxu0 0
        %1005 = vmatpush1.bf16.msra.mxu0 %v983
        %1006 = vmatprep.subr.bf16.mxu0 0
        %1007 = vmatpush1.bf16.msra.mxu0 %v984
        %1008 = vmatprep.subr.bf16.mxu0 0
        %1009 = vmatpush1.bf16.msra.mxu0 %v985
        %1010 = vmatprep.subr.bf16.mxu0 0
        %1011 = vmatpush1.bf16.msra.mxu0 0
        %1012 = vmatprep.subr.bf16.mxu0 0
        %1013 = vmatpush1.bf16.msra.mxu0 0
        %1014 = vmatprep.subr.bf16.mxu0 0
        %1015 = vmatpush1.bf16.msra.mxu0 0
        %1016 = vmatprep.subr.bf16.mxu0 0
        %1017 = vmatpush1.bf16.msra.mxu0 0
        %1018 = vmatprep.subr.bf16.mxu0 0
        %1019 = vmatpush1.bf16.msra.mxu0 0
        %1020 = vmatprep.subr.bf16.mxu0 0
        %1021 = vmatpush1.bf16.msra.mxu0 0
        %1022 = vmatprep.subr.bf16.mxu0 0
        %1023 = vmatpush1.bf16.msra.mxu0 0
        %1024 = vmatprep.subr.bf16.mxu0 0
        %1025 = vmatpush1.bf16.msra.mxu0 0
        %1026 = vmatprep.mubr.bf16.mxu0 0
        %1027 = vmatmul.mubr.bf16.gmra.mrb[0].mxu0 %v922
        %v1028 = vpop.f32.mrb[0].mxu0
        %v1029 = vadd.f32 %v944, %v1028
        %v1030 = vpop.f32.mrb[0].mxu0
        %v1031 = vpop.f32.mrb[0].mxu0
        %v1032 = vpop.f32.mrb[0].mxu0
        %1033 = vdwg.mxu0
        %1034 = vst [vmem:[%s8] sm:$0xff] %v1029
      $region98: #{ggsnn_forward.1} parent=47 // pred_fallthru
        _
      // Predicated region
      $region99: #{ggsnn_forward.1} parent=47 // pred_check
        %p1035 = pneg %p196
      $region100: #{ggsnn_forward.1} parent=47 // pred_check_branch
        %1037 = sbr.rel (%p1035) target = $region102
      $region101: #{ggsnn_forward.1} parent=47 // pred_region
        _
      $region102: #{ggsnn_forward.1} parent=47 // pred_fallthru
        _
      // Predicated region
      $region103: #{ggsnn_forward.1} parent=47 // pred_check
        %p1038 = pneg %p196
      $region104: #{ggsnn_forward.1} parent=47 // pred_check_branch
        %1040 = sbr.rel (%p1038) target = $region106
      $region105: #{ggsnn_forward.1} parent=47 // pred_region
        _
      $region106: #{ggsnn_forward.1} parent=47 // pred_fallthru
        _
    $region48: #{ggsnn_forward.1} parent=5 // pred_fallthru
      _
    %p1041 = scmp.le.s32.totalorder 2, %s14
    // Predicated region
    $region107: #{ggsnn_forward.1} parent=5 // pred_check
      %p1042 = pneg %p1041
    $region108: #{ggsnn_forward.1} parent=5 // pred_check_branch
      %1044 = sbr.rel (%p1042) target = $region110
    $region109: #{ggsnn_forward.1} parent=5 // pred_region
      %s1045 = ssub.s32 %s14, 2
    $region110: #{ggsnn_forward.1} parent=5 // pred_fallthru
      _
  $region6: #{ggsnn_forward.1} parent=0 // loop_footer
    %s18 = sadd.s32 1, %s14
  $region7: #{ggsnn_forward.1} parent=0 // loop_footer_branch
    %13 = sbr.rel target = $region3
  $region8: #{ggsnn_forward.1} parent=0 // loop_exit
    _
  %1046 = vsyncmov [#allocation5]
  %s1047 = vpop.sfrf %1046
  %p1048 = scmp.eq.s32.totalorder %s1047, 0
  %p1049 = pneg %p1048
  %1051 = shalt.err (%p1049)

</llo_original>
